<compile_context>
chip_gen: v7x
topology: tpu7x:2x2x1
jax: 0.10.0
libtpu: 0.0.40
codegen_flags: <defaults>
</compile_context>

<pallas_src>
import numpy as np
import jax
import jax.numpy as jnp
from jax.experimental import pallas as pl
from jax.experimental.pallas import tpu as pltpu


def _make_kernel(T, V, chunk, n_chunks):
    """Kernel closure over the static T/V split and epilogue chunking."""
    L = T * V

    def kernel(x_ref, pool_ref, et_ref, ev_ref,
               w1_ref, b1_ref, wt_ref, bt_ref, wv_ref, bv_ref, wc_ref, bc_ref,
               o_ref):
        # x block: (1, C, L) with L = T*V on the lane axis (lane-dense).
        x = x_ref[0]                                            # (C, L) f32

        # [x_t | x_v] = x @ pool : mean over V and mean over T in one MXU
        # pass, already concatenated along the (T+V) axis like the torch.cat.
        xp = jnp.dot(x, pool_ref[...],
                     preferred_element_type=jnp.float32)        # (C, T+V)

        # fcn: fused 1x1 conv (BN pre-folded into w1/b1) + HardSwish.
        h = jnp.dot(w1_ref[...], xp,
                    preferred_element_type=jnp.float32) + b1_ref[...]  # (Ci, T+V)
        h = h * jnp.clip(h + 3.0, 0.0, 6.0) * (1.0 / 6.0)

        h_t = h[:, :T]                                          # (Ci, T)
        h_v = h[:, T:]                                          # (Ci, V)

        # adaptive avg-pool of each stream (applied after the split), averaged
        x_c = 0.5 * (jnp.mean(h_t, axis=1, keepdims=True)
                     + jnp.mean(h_v, axis=1, keepdims=True))    # (Ci, 1)

        att_t = jax.nn.sigmoid(
            jnp.dot(wt_ref[...], h_t, preferred_element_type=jnp.float32)
            + bt_ref[...])                                      # (C, T)
        att_v = jax.nn.sigmoid(
            jnp.dot(wv_ref[...], h_v, preferred_element_type=jnp.float32)
            + bv_ref[...])                                      # (C, V)
        att_c = jax.nn.sigmoid(
            jnp.dot(wc_ref[...], x_c, preferred_element_type=jnp.float32)
            + bc_ref[...])                                      # (C, 1)

        # Pre-fuse the channel gate into the V factor: one vmul per output
        # element in the big epilogue instead of two.
        att_vc = att_v * att_c                                  # (C, V)

        if n_chunks == 1:
            # out[c, t*V + v] = att_t[c, t] * att_vc[c, v], built lane-dense
            # via the constant 0/1 expansion matrices.
            rep_t = jnp.dot(att_t, et_ref[...],
                            preferred_element_type=jnp.float32)   # (C, L)
            rep_v = jnp.dot(att_vc, ev_ref[...],
                            preferred_element_type=jnp.float32)   # (C, L)
            o_ref[0] = (rep_t * rep_v).astype(o_ref.dtype)
        else:
            # Chunked epilogue: bounded vreg live ranges + streamed stores.
            def body(k, carry):
                off = pl.multiple_of(k * chunk, chunk)
                rep_t = jnp.dot(att_t, et_ref[:, pl.ds(off, chunk)],
                                preferred_element_type=jnp.float32)
                rep_v = jnp.dot(att_vc, ev_ref[:, pl.ds(off, chunk)],
                                preferred_element_type=jnp.float32)
                o_ref[0, :, pl.ds(off, chunk)] = (rep_t * rep_v).astype(o_ref.dtype)
                return carry
            jax.lax.fori_loop(0, n_chunks, body, 0)

    return kernel


def stc_joint_att(x_nctv, params):
    """x_nctv: (N, C, T, V) float32 — matches the PyTorch module's input."""
    N, C, T, V = x_nctv.shape
    L = T * V
    Ci = params["w1"].shape[0]

    # Lane-dense view of the native NCTV layout: collapsing the trailing
    # contiguous (T, V) dims is a bitcast — no HBM copy (unlike a transpose).
    x3 = x_nctv.reshape(N, C, L)

    # Constant selection matrices (built host-side, fetched to VMEM once):
    #   pool[l, t]     = 1/V  if l//V == t   (mean over V  -> x_t)
    #   pool[l, T+v]   = 1/T  if l%V  == v   (mean over T  -> x_v)
    #   et[t, l] = 1{l//V == t},  ev[v, l] = 1{l%V == v}  (broadcast/expand)
    l_idx = np.arange(L)
    t_of_l = l_idx // V
    v_of_l = l_idx % V
    pool = np.zeros((L, T + V), np.float32)
    pool[l_idx, t_of_l] = 1.0 / V
    pool[l_idx, T + v_of_l] = 1.0 / T
    et = (t_of_l[None, :] == np.arange(T)[:, None]).astype(np.float32)   # (T, L)
    ev = (v_of_l[None, :] == np.arange(V)[:, None]).astype(np.float32)   # (V, L)

    # Epilogue lane chunk: largest multiple of 128 dividing L (<= 2048), else
    # whole row.  Keeps stores 128-lane aligned and live vregs bounded.
    chunk = L
    for c in range(128, min(L, 2048) + 1, 128):
        if L % c == 0:
            chunk = c
    n_chunks = L // chunk

    kernel = _make_kernel(T, V, chunk, n_chunks)

    def const_spec(shape):
        return pl.BlockSpec(shape, lambda n, _s=shape: (0,) * len(_s))

    # Rough VMEM budget: double-buffered in/out blocks + resident constants.
    block_bytes = C * L * 4
    const_bytes = 4 * (L * (T + V) + (T + V) * L + Ci * C + Ci + 3 * C * Ci + 3 * C)
    vmem_bytes = int(min(max(4 * block_bytes + const_bytes + (2 << 20), 8 << 20),
                         32 << 20))

    cost = pl.CostEstimate(
        flops=int(N * (4 * C * L * (T + V) + 4 * Ci * C * (T + V) + 3 * C * L)),
        transcendentals=int(N * C * (T + V + 1)),
        bytes_accessed=int(2 * N * C * L * 4 + const_bytes),
    )

    out3 = pl.pallas_call(
        kernel,
        out_shape=jax.ShapeDtypeStruct((N, C, L), jnp.float32),
        grid_spec=pltpu.PrefetchScalarGridSpec(
            num_scalar_prefetch=0,
            grid=(N,),
            in_specs=[
                pl.BlockSpec((1, C, L), lambda n: (n, 0, 0)),   # x (lane-dense)
                const_spec((L, T + V)),   # pool (means)
                const_spec((T, L)),       # expand_t
                const_spec((V, L)),       # expand_v
                const_spec((Ci, C)),      # w1 (BN folded)
                const_spec((Ci, 1)),      # b1 (BN folded)
                const_spec((C, Ci)),      # wt
                const_spec((C, 1)),       # bt
                const_spec((C, Ci)),      # wv
                const_spec((C, 1)),       # bv
                const_spec((C, Ci)),      # wc
                const_spec((C, 1)),       # bc
            ],
            out_specs=pl.BlockSpec((1, C, L), lambda n: (n, 0, 0)),
        ),
        compiler_params=pltpu.CompilerParams(
            dimension_semantics=("parallel",),
            vmem_limit_bytes=vmem_bytes,
        ),
        cost_estimate=cost,
    )(x3, jnp.asarray(pool), jnp.asarray(et), jnp.asarray(ev),
      params["w1"], params["b1"], params["wt"], params["bt"],
      params["wv"], params["bv"], params["wc"], params["bc"])

    # Free expansion of the trailing dim back to (T, V) — again a bitcast.
    return out3.reshape(N, C, T, V)


def _reference(x, p):
    """Pure-JAX reference of the same forward (NCTV in, NCTV out)."""
    N, C, T, V = x.shape
    x_t = x.mean(axis=3)                                      # (N, C, T)
    x_v = x.mean(axis=2)                                      # (N, C, V)
    cat = jnp.concatenate([x_t, x_v], axis=2)                 # (N, C, T+V)
    h = jnp.einsum("ic,ncl->nil", p["w1"], cat) + p["b1"][None]   # (N, Ci, T+V)
    h = h * jnp.clip(h + 3.0, 0.0, 6.0) / 6.0                 # HardSwish
    h_t, h_v = h[:, :, :T], h[:, :, T:]
    x_c = 0.5 * (h_t.mean(axis=2, keepdims=True)
                 + h_v.mean(axis=2, keepdims=True))           # (N, Ci, 1)
    att_t = jax.nn.sigmoid(jnp.einsum("ci,nit->nct", p["wt"], h_t) + p["bt"][None])
    att_v = jax.nn.sigmoid(jnp.einsum("ci,niv->ncv", p["wv"], h_v) + p["bv"][None])
    att_c = jax.nn.sigmoid(jnp.einsum("ci,nio->nco", p["wc"], x_c) + p["bc"][None])
    return (att_t[:, :, :, None] * att_v[:, :, None, :]
            * att_c[:, :, :, None])                           # (N, C, T, V)


def make_params(key, channel, reduct_ratio, bias=True):
    """Deterministic params with BatchNorm (eval) folded into the 1x1 conv."""
    ci = channel // reduct_ratio
    ks = jax.random.split(key, 12)
    scale = 0.1
    # Conv2d(channel -> ci, k=1): weight (ci, channel), bias (ci,)
    w1 = scale * jax.random.normal(ks[0], (ci, channel), jnp.float32)
    b1 = (scale * jax.random.normal(ks[1], (ci,), jnp.float32)
          if bias else jnp.zeros((ci,), jnp.float32))
    # BatchNorm2d(ci) in eval mode: fold gamma/beta/running stats.
    gamma = 1.0 + 0.1 * jax.random.normal(ks[2], (ci,), jnp.float32)
    beta = 0.1 * jax.random.normal(ks[3], (ci,), jnp.float32)
    r_mean = 0.05 * jax.random.normal(ks[4], (ci,), jnp.float32)
    r_var = jnp.abs(1.0 + 0.1 * jax.random.normal(ks[5], (ci,), jnp.float32))
    eps = 1e-5
    bn_scale = gamma / jnp.sqrt(r_var + eps)
    bn_shift = beta - r_mean * bn_scale
    w1_eff = w1 * bn_scale[:, None]                           # (ci, channel)
    b1_eff = (b1 * bn_scale + bn_shift)[:, None]              # (ci, 1)
    # conv_t / conv_v / conv_c: (channel, ci) weights, (channel, 1) biases.
    wt = scale * jax.random.normal(ks[6], (channel, ci), jnp.float32)
    bt = scale * jax.random.normal(ks[7], (channel, 1), jnp.float32)
    wv = scale * jax.random.normal(ks[8], (channel, ci), jnp.float32)
    bv = scale * jax.random.normal(ks[9], (channel, 1), jnp.float32)
    wc = scale * jax.random.normal(ks[10], (channel, ci), jnp.float32)
    bc = scale * jax.random.normal(ks[11], (channel, 1), jnp.float32)
    return dict(w1=w1_eff, b1=b1_eff, wt=wt, bt=bt, wv=wv, bv=bv, wc=wc, bc=bc)


if __name__ == "__main__":
    # Small shapes: N=2, channel=16 (reduct_ratio=4 -> Ci=4), T=16, V=8
    # -> flattened lane dim L = T*V = 128 (exactly lane-dense).
    N, C, T, V = 2, 16, 16, 8
    key = jax.random.PRNGKey(0)
    kx, kp = jax.random.split(key)
    x = jax.random.normal(kx, (N, C, T, V), jnp.float32)   # PyTorch NCTV layout
    params = make_params(kp, channel=C, reduct_ratio=4, bias=True)

    out = stc_joint_att(x, params)
    out = jax.block_until_ready(out)

    ref = _reference(x, params)
    assert out.shape == (N, C, T, V)
    assert jnp.allclose(out, ref, atol=2e-5, rtol=2e-5), "mismatch vs reference"

    print("KERNEL_OK")
</pallas_src>

<mosaic_0001>
module attributes {stable_mosaic.version = 11 : i64} {
  func.func @kernel(%arg0: i32, %arg1: memref<1x16x128xf32, #tpu.memory_space<vmem>>, %arg2: memref<128x24xf32, #tpu.memory_space<vmem>>, %arg3: memref<16x128xf32, #tpu.memory_space<vmem>>, %arg4: memref<8x128xf32, #tpu.memory_space<vmem>>, %arg5: memref<4x16xf32, #tpu.memory_space<vmem>>, %arg6: memref<4x1xf32, #tpu.memory_space<vmem>>, %arg7: memref<16x4xf32, #tpu.memory_space<vmem>>, %arg8: memref<16x1xf32, #tpu.memory_space<vmem>>, %arg9: memref<16x4xf32, #tpu.memory_space<vmem>>, %arg10: memref<16x1xf32, #tpu.memory_space<vmem>>, %arg11: memref<16x4xf32, #tpu.memory_space<vmem>>, %arg12: memref<16x1xf32, #tpu.memory_space<vmem>>, %arg13: memref<1x16x128xf32, #tpu.memory_space<vmem>>) attributes {dimension_semantics = [#tpu.dimension_semantics<parallel>], iteration_bounds = array<i64: 2>, scalar_prefetch = 0 : i64, scratch_operands = 0 : i64, tpu.core_type = #tpu.core_type<tc>, window_params = [{transform_indices = @transform_0, window_bounds = array<i64: 1, 16, 128>}, {pipeline_mode = #tpu.pipeline_mode<synchronous>, transform_indices = @transform_1, window_bounds = array<i64: 128, 24>}, {pipeline_mode = #tpu.pipeline_mode<synchronous>, transform_indices = @transform_2, window_bounds = array<i64: 16, 128>}, {pipeline_mode = #tpu.pipeline_mode<synchronous>, transform_indices = @transform_3, window_bounds = array<i64: 8, 128>}, {pipeline_mode = #tpu.pipeline_mode<synchronous>, transform_indices = @transform_4, window_bounds = array<i64: 4, 16>}, {pipeline_mode = #tpu.pipeline_mode<synchronous>, transform_indices = @transform_5, window_bounds = array<i64: 4, 1>}, {pipeline_mode = #tpu.pipeline_mode<synchronous>, transform_indices = @transform_6, window_bounds = array<i64: 16, 4>}, {pipeline_mode = #tpu.pipeline_mode<synchronous>, transform_indices = @transform_7, window_bounds = array<i64: 16, 1>}, {pipeline_mode = #tpu.pipeline_mode<synchronous>, transform_indices = @transform_8, window_bounds = array<i64: 16, 4>}, {pipeline_mode = #tpu.pipeline_mode<synchronous>, transform_indices = @transform_9, window_bounds = array<i64: 16, 1>}, {pipeline_mode = #tpu.pipeline_mode<synchronous>, transform_indices = @transform_10, window_bounds = array<i64: 16, 4>}, {pipeline_mode = #tpu.pipeline_mode<synchronous>, transform_indices = @transform_11, window_bounds = array<i64: 16, 1>}, {transform_indices = @transform_12, window_bounds = array<i64: 1, 16, 128>}]} {
    %c0 = arith.constant 0 : index
    %c0_0 = arith.constant 0 : index
    %c0_1 = arith.constant 0 : index
    %0 = vector.load %arg1[%c0, %c0_0, %c0_1] : memref<1x16x128xf32, #tpu.memory_space<vmem>>, vector<1x16x128xf32>
    %1 = vector.shape_cast %0 : vector<1x16x128xf32> to vector<16x128xf32>
    %c0_2 = arith.constant 0 : index
    %c0_3 = arith.constant 0 : index
    %2 = vector.load %arg2[%c0_2, %c0_3] : memref<128x24xf32, #tpu.memory_space<vmem>>, vector<128x24xf32>
    %cst = arith.constant dense<0.000000e+00> : vector<16x24xf32>
    %3 = tpu.matmul %1, %2, %cst {dimension_numbers = #tpu.dot_dimension_numbers<[1], [0], [0], [1], [0, 0, 1, 1], [], []>} : vector<16x128xf32>, vector<128x24xf32>, vector<16x24xf32> -> vector<16x24xf32>
    %c0_4 = arith.constant 0 : index
    %c0_5 = arith.constant 0 : index
    %4 = vector.load %arg5[%c0_4, %c0_5] : memref<4x16xf32, #tpu.memory_space<vmem>>, vector<4x16xf32>
    %cst_6 = arith.constant dense<0.000000e+00> : vector<4x24xf32>
    %5 = tpu.matmul %4, %3, %cst_6 {dimension_numbers = #tpu.dot_dimension_numbers<[1], [0], [0], [1], [0, 0, 1, 1], [], []>} : vector<4x16xf32>, vector<16x24xf32>, vector<4x24xf32> -> vector<4x24xf32>
    %c0_7 = arith.constant 0 : index
    %c0_8 = arith.constant 0 : index
    %6 = vector.load %arg6[%c0_7, %c0_8] : memref<4x1xf32, #tpu.memory_space<vmem>>, vector<4x1xf32>
    %7 = vector.broadcast %6 : vector<4x1xf32> to vector<4x24xf32>
    %8 = arith.addf %5, %7 : vector<4x24xf32>
    %cst_9 = arith.constant 3.000000e+00 : f32
    %9 = vector.broadcast %cst_9 : f32 to vector<4x24xf32>
    %10 = arith.addf %8, %9 : vector<4x24xf32>
    %cst_10 = arith.constant 0.000000e+00 : f32
    %cst_11 = arith.constant 6.000000e+00 : f32
    %11 = vector.broadcast %cst_10 : f32 to vector<4x24xf32>
    %12 = arith.maximumf %11, %10 : vector<4x24xf32>
    %13 = vector.broadcast %cst_11 : f32 to vector<4x24xf32>
    %14 = arith.minimumf %13, %12 : vector<4x24xf32>
    %15 = arith.mulf %8, %14 : vector<4x24xf32>
    %cst_12 = arith.constant 0.166666672 : f32
    %16 = vector.broadcast %cst_12 : f32 to vector<4x24xf32>
    %17 = arith.mulf %15, %16 : vector<4x24xf32>
    %18 = vector.extract_strided_slice %17 {offsets = [0, 0], sizes = [4, 16], strides = [1, 1]} : vector<4x24xf32> to vector<4x16xf32>
    %19 = vector.extract_strided_slice %17 {offsets = [0, 16], sizes = [4, 8], strides = [1, 1]} : vector<4x24xf32> to vector<4x8xf32>
    %cst_13 = arith.constant dense<0.000000e+00> : vector<4xf32>
    %20 = vector.multi_reduction <add>, %18, %cst_13 [1] : vector<4x16xf32> to vector<4xf32>
    %21 = vector.shape_cast %20 : vector<4xf32> to vector<4x1xf32>
    %cst_14 = arith.constant 1.600000e+01 : f32
    %22 = vector.broadcast %cst_14 : f32 to vector<4x1xf32>
    %23 = arith.divf %21, %22 : vector<4x1xf32>
    %cst_15 = arith.constant dense<0.000000e+00> : vector<4xf32>
    %24 = vector.multi_reduction <add>, %19, %cst_15 [1] : vector<4x8xf32> to vector<4xf32>
    %25 = vector.shape_cast %24 : vector<4xf32> to vector<4x1xf32>
    %cst_16 = arith.constant 8.000000e+00 : f32
    %26 = vector.broadcast %cst_16 : f32 to vector<4x1xf32>
    %27 = arith.divf %25, %26 : vector<4x1xf32>
    %28 = arith.addf %23, %27 : vector<4x1xf32>
    %cst_17 = arith.constant 5.000000e-01 : f32
    %29 = vector.broadcast %cst_17 : f32 to vector<4x1xf32>
    %30 = arith.mulf %29, %28 : vector<4x1xf32>
    %c0_18 = arith.constant 0 : index
    %c0_19 = arith.constant 0 : index
    %31 = vector.load %arg7[%c0_18, %c0_19] : memref<16x4xf32, #tpu.memory_space<vmem>>, vector<16x4xf32>
    %cst_20 = arith.constant dense<0.000000e+00> : vector<16x16xf32>
    %32 = tpu.matmul %31, %18, %cst_20 {dimension_numbers = #tpu.dot_dimension_numbers<[1], [0], [0], [1], [0, 0, 1, 1], [], []>} : vector<16x4xf32>, vector<4x16xf32>, vector<16x16xf32> -> vector<16x16xf32>
    %c0_21 = arith.constant 0 : index
    %c0_22 = arith.constant 0 : index
    %33 = vector.load %arg8[%c0_21, %c0_22] : memref<16x1xf32, #tpu.memory_space<vmem>>, vector<16x1xf32>
    %34 = vector.broadcast %33 : vector<16x1xf32> to vector<16x16xf32>
    %35 = arith.addf %32, %34 : vector<16x16xf32>
    %36 = arith.negf %35 : vector<16x16xf32>
    %37 = math.exp %36 : vector<16x16xf32>
    %cst_23 = arith.constant 1.000000e+00 : f32
    %38 = vector.broadcast %cst_23 : f32 to vector<16x16xf32>
    %39 = arith.addf %38, %37 : vector<16x16xf32>
    %40 = arith.divf %38, %39 : vector<16x16xf32>
    %c0_24 = arith.constant 0 : index
    %c0_25 = arith.constant 0 : index
    %41 = vector.load %arg9[%c0_24, %c0_25] : memref<16x4xf32, #tpu.memory_space<vmem>>, vector<16x4xf32>
    %cst_26 = arith.constant dense<0.000000e+00> : vector<16x8xf32>
    %42 = tpu.matmul %41, %19, %cst_26 {dimension_numbers = #tpu.dot_dimension_numbers<[1], [0], [0], [1], [0, 0, 1, 1], [], []>} : vector<16x4xf32>, vector<4x8xf32>, vector<16x8xf32> -> vector<16x8xf32>
    %c0_27 = arith.constant 0 : index
    %c0_28 = arith.constant 0 : index
    %43 = vector.load %arg10[%c0_27, %c0_28] : memref<16x1xf32, #tpu.memory_space<vmem>>, vector<16x1xf32>
    %44 = vector.broadcast %43 : vector<16x1xf32> to vector<16x8xf32>
    %45 = arith.addf %42, %44 : vector<16x8xf32>
    %46 = arith.negf %45 : vector<16x8xf32>
    %47 = math.exp %46 : vector<16x8xf32>
    %cst_29 = arith.constant 1.000000e+00 : f32
    %48 = vector.broadcast %cst_29 : f32 to vector<16x8xf32>
    %49 = arith.addf %48, %47 : vector<16x8xf32>
    %50 = arith.divf %48, %49 : vector<16x8xf32>
    %c0_30 = arith.constant 0 : index
    %c0_31 = arith.constant 0 : index
    %51 = vector.load %arg11[%c0_30, %c0_31] : memref<16x4xf32, #tpu.memory_space<vmem>>, vector<16x4xf32>
    %cst_32 = arith.constant dense<0.000000e+00> : vector<16x1xf32>
    %52 = tpu.matmul %51, %30, %cst_32 {dimension_numbers = #tpu.dot_dimension_numbers<[1], [0], [0], [1], [0, 0, 1, 1], [], []>} : vector<16x4xf32>, vector<4x1xf32>, vector<16x1xf32> -> vector<16x1xf32>
    %c0_33 = arith.constant 0 : index
    %c0_34 = arith.constant 0 : index
    %53 = vector.load %arg12[%c0_33, %c0_34] : memref<16x1xf32, #tpu.memory_space<vmem>>, vector<16x1xf32>
    %54 = arith.addf %52, %53 : vector<16x1xf32>
    %55 = arith.negf %54 : vector<16x1xf32>
    %56 = math.exp %55 : vector<16x1xf32>
    %cst_35 = arith.constant 1.000000e+00 : f32
    %57 = vector.broadcast %cst_35 : f32 to vector<16x1xf32>
    %58 = arith.addf %57, %56 : vector<16x1xf32>
    %59 = arith.divf %57, %58 : vector<16x1xf32>
    %60 = vector.broadcast %59 : vector<16x1xf32> to vector<16x8xf32>
    %61 = arith.mulf %50, %60 : vector<16x8xf32>
    %c0_36 = arith.constant 0 : index
    %c0_37 = arith.constant 0 : index
    %62 = vector.load %arg3[%c0_36, %c0_37] : memref<16x128xf32, #tpu.memory_space<vmem>>, vector<16x128xf32>
    %cst_38 = arith.constant dense<0.000000e+00> : vector<16x128xf32>
    %63 = tpu.matmul %40, %62, %cst_38 {dimension_numbers = #tpu.dot_dimension_numbers<[1], [0], [0], [1], [0, 0, 1, 1], [], []>} : vector<16x16xf32>, vector<16x128xf32>, vector<16x128xf32> -> vector<16x128xf32>
    %c0_39 = arith.constant 0 : index
    %c0_40 = arith.constant 0 : index
    %64 = vector.load %arg4[%c0_39, %c0_40] : memref<8x128xf32, #tpu.memory_space<vmem>>, vector<8x128xf32>
    %cst_41 = arith.constant dense<0.000000e+00> : vector<16x128xf32>
    %65 = tpu.matmul %61, %64, %cst_41 {dimension_numbers = #tpu.dot_dimension_numbers<[1], [0], [0], [1], [0, 0, 1, 1], [], []>} : vector<16x8xf32>, vector<8x128xf32>, vector<16x128xf32> -> vector<16x128xf32>
    %66 = arith.mulf %63, %65 : vector<16x128xf32>
    %c0_42 = arith.constant 0 : index
    %c0_43 = arith.constant 0 : index
    %c0_44 = arith.constant 0 : index
    %67 = vector.load %arg13[%c0_42, %c0_43, %c0_44] : memref<1x16x128xf32, #tpu.memory_space<vmem>>, vector<1x16x128xf32>
    %68 = vector.shape_cast %67 : vector<1x16x128xf32> to vector<16x128xf32>
    %69 = vector.shape_cast %66 : vector<16x128xf32> to vector<1x16x128xf32>
    tpu.vector_store %arg13[%c0_42, %c0_43, %c0_44], %69 {strides = array<i32>} : memref<1x16x128xf32, #tpu.memory_space<vmem>>, vector<1x16x128xf32>,
    return
  }
  func.func @transform_0(%arg0: i32) -> (i32, i32, i32) {
    %c0_i32 = arith.constant 0 : i32
    %c0_i32_0 = arith.constant 0 : i32
    %c0_i32_1 = arith.constant 0 : i32
    return %arg0, %c0_i32, %c0_i32_0 : i32, i32, i32
  }
  func.func @transform_1(%arg0: i32) -> (i32, i32) {
    %c0_i32 = arith.constant 0 : i32
    %c0_i32_0 = arith.constant 0 : i32
    %c0_i32_1 = arith.constant 0 : i32
    return %c0_i32, %c0_i32_0 : i32, i32
  }
  func.func @transform_2(%arg0: i32) -> (i32, i32) {
    %c0_i32 = arith.constant 0 : i32
    %c0_i32_0 = arith.constant 0 : i32
    %c0_i32_1 = arith.constant 0 : i32
    return %c0_i32, %c0_i32_0 : i32, i32
  }
  func.func @transform_3(%arg0: i32) -> (i32, i32) {
    %c0_i32 = arith.constant 0 : i32
    %c0_i32_0 = arith.constant 0 : i32
    %c0_i32_1 = arith.constant 0 : i32
    return %c0_i32, %c0_i32_0 : i32, i32
  }
  func.func @transform_4(%arg0: i32) -> (i32, i32) {
    %c0_i32 = arith.constant 0 : i32
    %c0_i32_0 = arith.constant 0 : i32
    %c0_i32_1 = arith.constant 0 : i32
    return %c0_i32, %c0_i32_0 : i32, i32
  }
  func.func @transform_5(%arg0: i32) -> (i32, i32) {
    %c0_i32 = arith.constant 0 : i32
    %c0_i32_0 = arith.constant 0 : i32
    %c0_i32_1 = arith.constant 0 : i32
    return %c0_i32, %c0_i32_0 : i32, i32
  }
  func.func @transform_6(%arg0: i32) -> (i32, i32) {
    %c0_i32 = arith.constant 0 : i32
    %c0_i32_0 = arith.constant 0 : i32
    %c0_i32_1 = arith.constant 0 : i32
    return %c0_i32, %c0_i32_0 : i32, i32
  }
  func.func @transform_7(%arg0: i32) -> (i32, i32) {
    %c0_i32 = arith.constant 0 : i32
    %c0_i32_0 = arith.constant 0 : i32
    %c0_i32_1 = arith.constant 0 : i32
    return %c0_i32, %c0_i32_0 : i32, i32
  }
  func.func @transform_8(%arg0: i32) -> (i32, i32) {
    %c0_i32 = arith.constant 0 : i32
    %c0_i32_0 = arith.constant 0 : i32
    %c0_i32_1 = arith.constant 0 : i32
    return %c0_i32, %c0_i32_0 : i32, i32
  }
  func.func @transform_9(%arg0: i32) -> (i32, i32) {
    %c0_i32 = arith.constant 0 : i32
    %c0_i32_0 = arith.constant 0 : i32
    %c0_i32_1 = arith.constant 0 : i32
    return %c0_i32, %c0_i32_0 : i32, i32
  }
  func.func @transform_10(%arg0: i32) -> (i32, i32) {
    %c0_i32 = arith.constant 0 : i32
    %c0_i32_0 = arith.constant 0 : i32
    %c0_i32_1 = arith.constant 0 : i32
    return %c0_i32, %c0_i32_0 : i32, i32
  }
  func.func @transform_11(%arg0: i32) -> (i32, i32) {
    %c0_i32 = arith.constant 0 : i32
    %c0_i32_0 = arith.constant 0 : i32
    %c0_i32_1 = arith.constant 0 : i32
    return %c0_i32, %c0_i32_0 : i32, i32
  }
  func.func @transform_12(%arg0: i32) -> (i32, i32, i32) {
    %c0_i32 = arith.constant 0 : i32
    %c0_i32_0 = arith.constant 0 : i32
    %c0_i32_1 = arith.constant 0 : i32
    return %arg0, %c0_i32, %c0_i32_0 : i32, i32, i32
  }
}

</mosaic_0001>

<llo_original>
// kernel: tpu_custom_call.1
$region0: #{tpu_custom_call.1}
  #allocation0 [shape = 'u32[]', space=smem, size = 0x4, offset = 0x4, fixed_abs, tag = 'smem constant byte address 0x4 - core index']
  #allocation1 [shape = 'u32[144,128]{1,0:T(1,128)}', space=vmem, size = 0x12000, scoped, tag = 'internal scratch']
  %s0 = inlined_call_operand.vmem [shape: f32[2,16,128], index: 0, kind: input, shape index: {}]
  %s1 = inlined_call_operand.vmem [shape: f32[128,24], index: 1, kind: input, shape index: {}]
  %s2 = inlined_call_operand.vmem [shape: f32[16,128], index: 2, kind: input, shape index: {}]
  %s3 = inlined_call_operand.vmem [shape: f32[8,128], index: 3, kind: input, shape index: {}]
  %s4 = inlined_call_operand.vmem [shape: f32[4,16], index: 4, kind: input, shape index: {}]
  %s5 = inlined_call_operand.vmem [shape: f32[4,1], index: 5, kind: input, shape index: {}]
  %s6 = inlined_call_operand.vmem [shape: f32[16,4], index: 6, kind: input, shape index: {}]
  %s7 = inlined_call_operand.vmem [shape: f32[16,1], index: 7, kind: input, shape index: {}]
  %s8 = inlined_call_operand.vmem [shape: f32[16,4], index: 8, kind: input, shape index: {}]
  %s9 = inlined_call_operand.vmem [shape: f32[16,1], index: 9, kind: input, shape index: {}]
  %s10 = inlined_call_operand.vmem [shape: f32[16,4], index: 10, kind: input, shape index: {}]
  %s11 = inlined_call_operand.vmem [shape: f32[16,1], index: 11, kind: input, shape index: {}]
  %s12 = inlined_call_operand.hbm [shape: f32[2,16,128], index: 12, kind: output, shape index: {}]
  %s13 = sld [smem:[#allocation0]]
  $region81: #{tpu_custom_call.1} parent=0
    _
  %s15 = ssub.s32 1, %s13
  %s16 = scalar_select 0, %s15, %s13
  $region1: #{tpu_custom_call.1} parent=0
    #allocation2 [shape = 'u8[16384]{0}', space=vmem, size = 0x4000, scoped, tag = 'output window, operand 0']
    #allocation3 [shape = 's32[2]{0}', space=sflag, size = 0x8, scoped, tag = 'scoped memory for tpu_custom_call.1']
    %17 = vsyncpa [#allocation3], 0
    %s18 = scalar_lea.sflag [#allocation3], 1
    %19 = vsyncpa %s18, 0
    loop: start=0, step=1, limit=4
    $region2: #{tpu_custom_call.1} parent=1 // loop_pre_header
      _
    $region3: #{tpu_custom_call.1} parent=1 // loop_header
      %s21 = sphi 0, %s25
      %p22 = scmp.ge.s32.totalorder %s21, 4
      %s31 = sphi 0, %s33
      %s34 = sphi 0, %s31
      %s35 = sphi 0, %s34
      %s51 = sphi 0, %s35
      %s55 = sphi 0, %s55
      %s57 = sphi 0, %s55
      %s58 = sphi 0, %s57
      %s72 = sphi 0, %s58
      %s76 = sphi 0, %s76
      %s78 = sphi 0, %s76
      %s79 = sphi 0, %s78
      %s93 = sphi 0, %s79
      %s97 = sphi 0, %s97
      %s99 = sphi 0, %s97
      %s100 = sphi 0, %s99
      %s114 = sphi 0, %s100
      %s118 = sphi 0, %s118
      %s120 = sphi 0, %s118
      %s121 = sphi 0, %s120
      %s135 = sphi 0, %s121
      %s139 = sphi 0, %s139
      %s141 = sphi 0, %s139
      %s142 = sphi 0, %s141
      %s156 = sphi 0, %s142
      %s160 = sphi 0, %s160
      %s162 = sphi 0, %s160
      %s163 = sphi 0, %s162
      %s177 = sphi 0, %s163
      %s181 = sphi 0, %s181
      %s183 = sphi 0, %s181
      %s184 = sphi 0, %s183
      %s198 = sphi 0, %s184
      %s202 = sphi 0, %s202
      %s204 = sphi 0, %s202
      %s205 = sphi 0, %s204
      %s219 = sphi 0, %s205
      %s223 = sphi 0, %s223
      %s225 = sphi 0, %s223
      %s226 = sphi 0, %s225
      %s240 = sphi 0, %s226
      %s244 = sphi 0, %s244
      %s246 = sphi 0, %s244
      %s247 = sphi 0, %s246
      %s261 = sphi 0, %s247
      %s265 = sphi 0, %s265
      %s267 = sphi 0, %s265
      %s268 = sphi 0, %s267
      %s282 = sphi 0, %s268
      %s288 = sphi 0, %s290
      %s291 = sphi 0, %s288
      %s292 = sphi 0, %s291
      %s308 = sphi 0, %s292
    $region4: #{tpu_custom_call.1} parent=1 // loop_header_branch
      %24 = sbr.rel (%p22) target = $region8
    $region5: #{tpu_custom_call.1} parent=1 // loop_body
      %s26 = ssub.s32 %s21, 1
      %s27 = ssub.s32 %s21, 2
      %s28 = sadd.s32 %s21, 1
      %s29 = ssub.s32 %s21, %s28
      %p30 = scmp.eq.s32.totalorder %s29, 0
      %s32 = sadd.s32 %s31, 1
      %s33 = scalar_select %p30, %s31, %s32
      %p36 = pneg %p30
      %p37 = scmp.eq.s32.totalorder %s21, 1
      %p38 = por %p36, %p37
      %p39 = scmp.ne.s32.totalorder %s31, %s34
      %p40 = scmp.eq.s32.totalorder %s21, 0
      %p41 = por %p39, %p40
      %p42 = scmp.ne.s32.totalorder %s31, %s34
      %p43 = scmp.eq.s32.totalorder %s26, 1
      %p44 = por %p42, %p43
      %p45 = scmp.ne.s32.totalorder %s34, %s35
      %p46 = scmp.eq.s32.totalorder %s26, 0
      %p47 = por %p45, %p46
      %p48 = scmp.ne.s32.totalorder %s34, %s35
      %p49 = scmp.eq.s32.totalorder %s27, 1
      %p50 = por %p48, %p49
      %p52 = scmp.ne.s32.totalorder %s35, %s51
      %p53 = scmp.eq.s32.totalorder %s27, 0
      %p54 = por %p52, %p53
      %s56 = sadd.s32 %s55, 1
      %p59 = scmp.eq.s32.totalorder %s21, 1
      %p60 = scmp.ne.s32.totalorder %s55, %s57
      %p61 = scmp.eq.s32.totalorder %s21, 0
      %p62 = por %p60, %p61
      %p63 = scmp.ne.s32.totalorder %s55, %s57
      %p64 = scmp.eq.s32.totalorder %s26, 1
      %p65 = por %p63, %p64
      %p66 = scmp.ne.s32.totalorder %s57, %s58
      %p67 = scmp.eq.s32.totalorder %s26, 0
      %p68 = por %p66, %p67
      %p69 = scmp.ne.s32.totalorder %s57, %s58
      %p70 = scmp.eq.s32.totalorder %s27, 1
      %p71 = por %p69, %p70
      %p73 = scmp.ne.s32.totalorder %s58, %s72
      %p74 = scmp.eq.s32.totalorder %s27, 0
      %p75 = por %p73, %p74
      %s77 = sadd.s32 %s76, 1
      %p80 = scmp.eq.s32.totalorder %s21, 1
      %p81 = scmp.ne.s32.totalorder %s76, %s78
      %p82 = scmp.eq.s32.totalorder %s21, 0
      %p83 = por %p81, %p82
      %p84 = scmp.ne.s32.totalorder %s76, %s78
      %p85 = scmp.eq.s32.totalorder %s26, 1
      %p86 = por %p84, %p85
      %p87 = scmp.ne.s32.totalorder %s78, %s79
      %p88 = scmp.eq.s32.totalorder %s26, 0
      %p89 = por %p87, %p88
      %p90 = scmp.ne.s32.totalorder %s78, %s79
      %p91 = scmp.eq.s32.totalorder %s27, 1
      %p92 = por %p90, %p91
      %p94 = scmp.ne.s32.totalorder %s79, %s93
      %p95 = scmp.eq.s32.totalorder %s27, 0
      %p96 = por %p94, %p95
      %s98 = sadd.s32 %s97, 1
      %p101 = scmp.eq.s32.totalorder %s21, 1
      %p102 = scmp.ne.s32.totalorder %s97, %s99
      %p103 = scmp.eq.s32.totalorder %s21, 0
      %p104 = por %p102, %p103
      %p105 = scmp.ne.s32.totalorder %s97, %s99
      %p106 = scmp.eq.s32.totalorder %s26, 1
      %p107 = por %p105, %p106
      %p108 = scmp.ne.s32.totalorder %s99, %s100
      %p109 = scmp.eq.s32.totalorder %s26, 0
      %p110 = por %p108, %p109
      %p111 = scmp.ne.s32.totalorder %s99, %s100
      %p112 = scmp.eq.s32.totalorder %s27, 1
      %p113 = por %p111, %p112
      %p115 = scmp.ne.s32.totalorder %s100, %s114
      %p116 = scmp.eq.s32.totalorder %s27, 0
      %p117 = por %p115, %p116
      %s119 = sadd.s32 %s118, 1
      %p122 = scmp.eq.s32.totalorder %s21, 1
      %p123 = scmp.ne.s32.totalorder %s118, %s120
      %p124 = scmp.eq.s32.totalorder %s21, 0
      %p125 = por %p123, %p124
      %p126 = scmp.ne.s32.totalorder %s118, %s120
      %p127 = scmp.eq.s32.totalorder %s26, 1
      %p128 = por %p126, %p127
      %p129 = scmp.ne.s32.totalorder %s120, %s121
      %p130 = scmp.eq.s32.totalorder %s26, 0
      %p131 = por %p129, %p130
      %p132 = scmp.ne.s32.totalorder %s120, %s121
      %p133 = scmp.eq.s32.totalorder %s27, 1
      %p134 = por %p132, %p133
      %p136 = scmp.ne.s32.totalorder %s121, %s135
      %p137 = scmp.eq.s32.totalorder %s27, 0
      %p138 = por %p136, %p137
      %s140 = sadd.s32 %s139, 1
      %p143 = scmp.eq.s32.totalorder %s21, 1
      %p144 = scmp.ne.s32.totalorder %s139, %s141
      %p145 = scmp.eq.s32.totalorder %s21, 0
      %p146 = por %p144, %p145
      %p147 = scmp.ne.s32.totalorder %s139, %s141
      %p148 = scmp.eq.s32.totalorder %s26, 1
      %p149 = por %p147, %p148
      %p150 = scmp.ne.s32.totalorder %s141, %s142
      %p151 = scmp.eq.s32.totalorder %s26, 0
      %p152 = por %p150, %p151
      %p153 = scmp.ne.s32.totalorder %s141, %s142
      %p154 = scmp.eq.s32.totalorder %s27, 1
      %p155 = por %p153, %p154
      %p157 = scmp.ne.s32.totalorder %s142, %s156
      %p158 = scmp.eq.s32.totalorder %s27, 0
      %p159 = por %p157, %p158
      %s161 = sadd.s32 %s160, 1
      %p164 = scmp.eq.s32.totalorder %s21, 1
      %p165 = scmp.ne.s32.totalorder %s160, %s162
      %p166 = scmp.eq.s32.totalorder %s21, 0
      %p167 = por %p165, %p166
      %p168 = scmp.ne.s32.totalorder %s160, %s162
      %p169 = scmp.eq.s32.totalorder %s26, 1
      %p170 = por %p168, %p169
      %p171 = scmp.ne.s32.totalorder %s162, %s163
      %p172 = scmp.eq.s32.totalorder %s26, 0
      %p173 = por %p171, %p172
      %p174 = scmp.ne.s32.totalorder %s162, %s163
      %p175 = scmp.eq.s32.totalorder %s27, 1
      %p176 = por %p174, %p175
      %p178 = scmp.ne.s32.totalorder %s163, %s177
      %p179 = scmp.eq.s32.totalorder %s27, 0
      %p180 = por %p178, %p179
      %s182 = sadd.s32 %s181, 1
      %p185 = scmp.eq.s32.totalorder %s21, 1
      %p186 = scmp.ne.s32.totalorder %s181, %s183
      %p187 = scmp.eq.s32.totalorder %s21, 0
      %p188 = por %p186, %p187
      %p189 = scmp.ne.s32.totalorder %s181, %s183
      %p190 = scmp.eq.s32.totalorder %s26, 1
      %p191 = por %p189, %p190
      %p192 = scmp.ne.s32.totalorder %s183, %s184
      %p193 = scmp.eq.s32.totalorder %s26, 0
      %p194 = por %p192, %p193
      %p195 = scmp.ne.s32.totalorder %s183, %s184
      %p196 = scmp.eq.s32.totalorder %s27, 1
      %p197 = por %p195, %p196
      %p199 = scmp.ne.s32.totalorder %s184, %s198
      %p200 = scmp.eq.s32.totalorder %s27, 0
      %p201 = por %p199, %p200
      %s203 = sadd.s32 %s202, 1
      %p206 = scmp.eq.s32.totalorder %s21, 1
      %p207 = scmp.ne.s32.totalorder %s202, %s204
      %p208 = scmp.eq.s32.totalorder %s21, 0
      %p209 = por %p207, %p208
      %p210 = scmp.ne.s32.totalorder %s202, %s204
      %p211 = scmp.eq.s32.totalorder %s26, 1
      %p212 = por %p210, %p211
      %p213 = scmp.ne.s32.totalorder %s204, %s205
      %p214 = scmp.eq.s32.totalorder %s26, 0
      %p215 = por %p213, %p214
      %p216 = scmp.ne.s32.totalorder %s204, %s205
      %p217 = scmp.eq.s32.totalorder %s27, 1
      %p218 = por %p216, %p217
      %p220 = scmp.ne.s32.totalorder %s205, %s219
      %p221 = scmp.eq.s32.totalorder %s27, 0
      %p222 = por %p220, %p221
      %s224 = sadd.s32 %s223, 1
      %p227 = scmp.eq.s32.totalorder %s21, 1
      %p228 = scmp.ne.s32.totalorder %s223, %s225
      %p229 = scmp.eq.s32.totalorder %s21, 0
      %p230 = por %p228, %p229
      %p231 = scmp.ne.s32.totalorder %s223, %s225
      %p232 = scmp.eq.s32.totalorder %s26, 1
      %p233 = por %p231, %p232
      %p234 = scmp.ne.s32.totalorder %s225, %s226
      %p235 = scmp.eq.s32.totalorder %s26, 0
      %p236 = por %p234, %p235
      %p237 = scmp.ne.s32.totalorder %s225, %s226
      %p238 = scmp.eq.s32.totalorder %s27, 1
      %p239 = por %p237, %p238
      %p241 = scmp.ne.s32.totalorder %s226, %s240
      %p242 = scmp.eq.s32.totalorder %s27, 0
      %p243 = por %p241, %p242
      %s245 = sadd.s32 %s244, 1
      %p248 = scmp.eq.s32.totalorder %s21, 1
      %p249 = scmp.ne.s32.totalorder %s244, %s246
      %p250 = scmp.eq.s32.totalorder %s21, 0
      %p251 = por %p249, %p250
      %p252 = scmp.ne.s32.totalorder %s244, %s246
      %p253 = scmp.eq.s32.totalorder %s26, 1
      %p254 = por %p252, %p253
      %p255 = scmp.ne.s32.totalorder %s246, %s247
      %p256 = scmp.eq.s32.totalorder %s26, 0
      %p257 = por %p255, %p256
      %p258 = scmp.ne.s32.totalorder %s246, %s247
      %p259 = scmp.eq.s32.totalorder %s27, 1
      %p260 = por %p258, %p259
      %p262 = scmp.ne.s32.totalorder %s247, %s261
      %p263 = scmp.eq.s32.totalorder %s27, 0
      %p264 = por %p262, %p263
      %s266 = sadd.s32 %s265, 1
      %p269 = scmp.eq.s32.totalorder %s21, 1
      %p270 = scmp.ne.s32.totalorder %s265, %s267
      %p271 = scmp.eq.s32.totalorder %s21, 0
      %p272 = por %p270, %p271
      %p273 = scmp.ne.s32.totalorder %s265, %s267
      %p274 = scmp.eq.s32.totalorder %s26, 1
      %p275 = por %p273, %p274
      %p276 = scmp.ne.s32.totalorder %s267, %s268
      %p277 = scmp.eq.s32.totalorder %s26, 0
      %p278 = por %p276, %p277
      %p279 = scmp.ne.s32.totalorder %s267, %s268
      %p280 = scmp.eq.s32.totalorder %s27, 1
      %p281 = por %p279, %p280
      %p283 = scmp.ne.s32.totalorder %s268, %s282
      %p284 = scmp.eq.s32.totalorder %s27, 0
      %p285 = por %p283, %p284
      %s286 = ssub.s32 %s21, %s28
      %p287 = scmp.eq.s32.totalorder %s286, 0
      %s289 = sadd.s32 %s288, 1
      %s290 = scalar_select %p287, %s288, %s289
      %p293 = pneg %p287
      %p294 = scmp.eq.s32.totalorder %s21, 1
      %p295 = por %p293, %p294
      %p296 = scmp.ne.s32.totalorder %s288, %s291
      %p297 = scmp.eq.s32.totalorder %s21, 0
      %p298 = por %p296, %p297
      %p299 = scmp.ne.s32.totalorder %s288, %s291
      %p300 = scmp.eq.s32.totalorder %s26, 1
      %p301 = por %p299, %p300
      %p302 = scmp.ne.s32.totalorder %s291, %s292
      %p303 = scmp.eq.s32.totalorder %s26, 0
      %p304 = por %p302, %p303
      %p305 = scmp.ne.s32.totalorder %s291, %s292
      %p306 = scmp.eq.s32.totalorder %s27, 1
      %p307 = por %p305, %p306
      %p309 = scmp.ne.s32.totalorder %s292, %s308
      %p310 = scmp.eq.s32.totalorder %s27, 0
      %p311 = por %p309, %p310
      %p312 = scmp.le.s32.totalorder 1, %s21
      %p313 = scmp.lt.s32.totalorder %s21, 3
      %p314 = pnand %p312, %p313
      %p315 = pneg %p314
      // Predicated region
      $region9: #{tpu_custom_call.1} parent=5 // pred_check
        _
      $region10: #{tpu_custom_call.1} parent=5 // pred_check_branch
        %317 = sbr.rel (%p314) target = $region12
      $region11: #{tpu_custom_call.1} parent=5 // pred_region
        %s318 = ssub.s32 %s21, 1
        // Predicated region
        $region13: #{tpu_custom_call.1} parent=11 // pred_check
          %p319 = pneg %p68
        $region14: #{tpu_custom_call.1} parent=11 // pred_check_branch
          %321 = sbr.rel (%p319) target = $region16
        $region15: #{tpu_custom_call.1} parent=11 // pred_region
          _
        $region16: #{tpu_custom_call.1} parent=11 // pred_fallthru
          _
        // Predicated region
        $region17: #{tpu_custom_call.1} parent=11 // pred_check
          %p322 = pneg %p89
        $region18: #{tpu_custom_call.1} parent=11 // pred_check_branch
          %324 = sbr.rel (%p322) target = $region20
        $region19: #{tpu_custom_call.1} parent=11 // pred_region
          _
        $region20: #{tpu_custom_call.1} parent=11 // pred_fallthru
          _
        // Predicated region
        $region21: #{tpu_custom_call.1} parent=11 // pred_check
          %p325 = pneg %p110
        $region22: #{tpu_custom_call.1} parent=11 // pred_check_branch
          %327 = sbr.rel (%p325) target = $region24
        $region23: #{tpu_custom_call.1} parent=11 // pred_region
          _
        $region24: #{tpu_custom_call.1} parent=11 // pred_fallthru
          _
        // Predicated region
        $region25: #{tpu_custom_call.1} parent=11 // pred_check
          %p328 = pneg %p131
        $region26: #{tpu_custom_call.1} parent=11 // pred_check_branch
          %330 = sbr.rel (%p328) target = $region28
        $region27: #{tpu_custom_call.1} parent=11 // pred_region
          _
        $region28: #{tpu_custom_call.1} parent=11 // pred_fallthru
          _
        // Predicated region
        $region29: #{tpu_custom_call.1} parent=11 // pred_check
          %p331 = pneg %p152
        $region30: #{tpu_custom_call.1} parent=11 // pred_check_branch
          %333 = sbr.rel (%p331) target = $region32
        $region31: #{tpu_custom_call.1} parent=11 // pred_region
          _
        $region32: #{tpu_custom_call.1} parent=11 // pred_fallthru
          _
        // Predicated region
        $region33: #{tpu_custom_call.1} parent=11 // pred_check
          %p334 = pneg %p173
        $region34: #{tpu_custom_call.1} parent=11 // pred_check_branch
          %336 = sbr.rel (%p334) target = $region36
        $region35: #{tpu_custom_call.1} parent=11 // pred_region
          _
        $region36: #{tpu_custom_call.1} parent=11 // pred_fallthru
          _
        // Predicated region
        $region37: #{tpu_custom_call.1} parent=11 // pred_check
          %p337 = pneg %p194
        $region38: #{tpu_custom_call.1} parent=11 // pred_check_branch
          %339 = sbr.rel (%p337) target = $region40
        $region39: #{tpu_custom_call.1} parent=11 // pred_region
          _
        $region40: #{tpu_custom_call.1} parent=11 // pred_fallthru
          _
        // Predicated region
        $region41: #{tpu_custom_call.1} parent=11 // pred_check
          %p340 = pneg %p215
        $region42: #{tpu_custom_call.1} parent=11 // pred_check_branch
          %342 = sbr.rel (%p340) target = $region44
        $region43: #{tpu_custom_call.1} parent=11 // pred_region
          _
        $region44: #{tpu_custom_call.1} parent=11 // pred_fallthru
          _
        // Predicated region
        $region45: #{tpu_custom_call.1} parent=11 // pred_check
          %p343 = pneg %p236
        $region46: #{tpu_custom_call.1} parent=11 // pred_check_branch
          %345 = sbr.rel (%p343) target = $region48
        $region47: #{tpu_custom_call.1} parent=11 // pred_region
          _
        $region48: #{tpu_custom_call.1} parent=11 // pred_fallthru
          _
        // Predicated region
        $region49: #{tpu_custom_call.1} parent=11 // pred_check
          %p346 = pneg %p257
        $region50: #{tpu_custom_call.1} parent=11 // pred_check_branch
          %348 = sbr.rel (%p346) target = $region52
        $region51: #{tpu_custom_call.1} parent=11 // pred_region
          _
        $region52: #{tpu_custom_call.1} parent=11 // pred_fallthru
          _
        // Predicated region
        $region53: #{tpu_custom_call.1} parent=11 // pred_check
          %p349 = pneg %p278
        $region54: #{tpu_custom_call.1} parent=11 // pred_check_branch
          %351 = sbr.rel (%p349) target = $region56
        $region55: #{tpu_custom_call.1} parent=11 // pred_region
          _
        $region56: #{tpu_custom_call.1} parent=11 // pred_fallthru
          _
      $region12: #{tpu_custom_call.1} parent=5 // pred_fallthru
        _
      %p352 = scmp.lt.s32.totalorder %s21, 2
      // Predicated region
      $region57: #{tpu_custom_call.1} parent=5 // pred_check
        %p353 = pneg %p352
      $region58: #{tpu_custom_call.1} parent=5 // pred_check_branch
        %355 = sbr.rel (%p353) target = $region60
      $region59: #{tpu_custom_call.1} parent=5 // pred_region
        // Predicated region
        $region61: #{tpu_custom_call.1} parent=59 // pred_check
          %p356 = pneg %p41
        $region62: #{tpu_custom_call.1} parent=59 // pred_check_branch
          %358 = sbr.rel (%p356) target = $region64
        $region63: #{tpu_custom_call.1} parent=59 // pred_region
          %p359 = scmp.lt.s32.totalorder %s21, 1
          %s360 = scalar_select %p359, %s21, 1
          %s361 = smul.addr %s360, 2
          %s362 = smul.addr %s361, 8
          %s363 = scalar_lea.vmem %s0, %s362
        $region64: #{tpu_custom_call.1} parent=59 // pred_fallthru
          _
      $region60: #{tpu_custom_call.1} parent=5 // pred_fallthru
        _
      %p364 = scmp.le.s32.totalorder 1, %s21
      %p365 = scmp.lt.s32.totalorder %s21, 3
      %p366 = pnand %p364, %p365
      %p367 = pneg %p366
      // Predicated region
      $region65: #{tpu_custom_call.1} parent=5 // pred_check
        _
      $region66: #{tpu_custom_call.1} parent=5 // pred_check_branch
        %369 = sbr.rel (%p366) target = $region68
      $region67: #{tpu_custom_call.1} parent=5 // pred_region
        %s370 = ssub.s32 %s21, 1
        %p371 = scmp.lt.s32.totalorder %s26, 1
        %s372 = scalar_select %p371, %s26, 1
        %s373 = smul.addr %s372, 2
        %s374 = smul.addr %s373, 8
        %s375 = scalar_lea.vmem %s0, %s374
        %p376 = pneg %p47
        %p377 = pneg %p44
        %p378 = pneg %p68
        %p379 = pneg %p65
        %p380 = pneg %p89
        %p381 = pneg %p86
        %p382 = pneg %p110
        %p383 = pneg %p107
        %p384 = pneg %p131
        %p385 = pneg %p128
        %p386 = pneg %p152
        %p387 = pneg %p149
        %p388 = pneg %p173
        %p389 = pneg %p170
        %p390 = pneg %p194
        %p391 = pneg %p191
        %p392 = pneg %p215
        %p393 = pneg %p212
        %p394 = pneg %p236
        %p395 = pneg %p233
        %p396 = pneg %p257
        %p397 = pneg %p254
        %p398 = pneg %p278
        %p399 = pneg %p275
        %p400 = pneg %p304
        %p401 = pneg %p301
        %s402 = sand.u32 %s291, 1
        %s403 = scalar_lea.sflag [#allocation3], %s402
        %s404 = sand.u32 %s291, 1
        %s405 = smul.addr %s404, 16
        %s406 = scalar_lea.vmem [#allocation2], %s405
        %p407 = scmp.lt.s32.totalorder %s26, 1
        %s408 = scalar_select %p407, %s26, 1
        %s409 = smul.addr %s408, 2
        %s410 = smul.addr %s409, 8
        %s411 = scalar_lea.vmem %s0, %s410
        %v412 = vld [vmem:[%s411] sm:$0xff]
        %v413 = vld [vmem:[%s411 + $0x8] sm:$0xff]
        %v414 = vld [vmem:[%s1] sm:$0xff]
        %v415 = vld [vmem:[%s1 + $0x8] sm:$0xff]
        %v416 = vld [vmem:[%s1 + $0x10] sm:$0xff]
        %v417 = vld [vmem:[%s1 + $0x18] sm:$0xff]
        %v418 = vld [vmem:[%s1 + $0x20] sm:$0xff]
        %v419 = vld [vmem:[%s1 + $0x28] sm:$0xff]
        %v420 = vld [vmem:[%s1 + $0x30] sm:$0xff]
        %v421 = vld [vmem:[%s1 + $0x38] sm:$0xff]
        %v422 = vld [vmem:[%s1 + $0x40] sm:$0xff]
        %v423 = vld [vmem:[%s1 + $0x48] sm:$0xff]
        %v424 = vld [vmem:[%s1 + $0x50] sm:$0xff]
        %v425 = vld [vmem:[%s1 + $0x58] sm:$0xff]
        %v426 = vld [vmem:[%s1 + $0x60] sm:$0xff]
        %v427 = vld [vmem:[%s1 + $0x68] sm:$0xff]
        %v428 = vld [vmem:[%s1 + $0x70] sm:$0xff]
        %v429 = vld [vmem:[%s1 + $0x78] sm:$0xff]
        %430 = vmatprep.subr.mxu0 0.0
        %431 = vmatpush1.msra.mxu0 %v414
        %432 = vmatprep.subr.mxu0 0.0
        %433 = vmatpush1.msra.mxu0 %v415
        %434 = vmatprep.subr.mxu0 0.0
        %435 = vmatpush1.msra.mxu0 %v416
        %436 = vmatprep.subr.mxu0 0.0
        %437 = vmatpush1.msra.mxu0 %v417
        %438 = vmatprep.subr.mxu0 0.0
        %439 = vmatpush1.msra.mxu0 %v418
        %440 = vmatprep.subr.mxu0 0.0
        %441 = vmatpush1.msra.mxu0 %v419
        %442 = vmatprep.subr.mxu0 0.0
        %443 = vmatpush1.msra.mxu0 %v420
        %444 = vmatprep.subr.mxu0 0.0
        %445 = vmatpush1.msra.mxu0 %v421
        %446 = vmatprep.subr.mxu0 0.0
        %447 = vmatpush1.msra.mxu0 %v422
        %448 = vmatprep.subr.mxu0 0.0
        %449 = vmatpush1.msra.mxu0 %v423
        %450 = vmatprep.subr.mxu0 0.0
        %451 = vmatpush1.msra.mxu0 %v424
        %452 = vmatprep.subr.mxu0 0.0
        %453 = vmatpush1.msra.mxu0 %v425
        %454 = vmatprep.subr.mxu0 0.0
        %455 = vmatpush1.msra.mxu0 %v426
        %456 = vmatprep.subr.mxu0 0.0
        %457 = vmatpush1.msra.mxu0 %v427
        %458 = vmatprep.subr.mxu0 0.0
        %459 = vmatpush1.msra.mxu0 %v428
        %460 = vmatprep.subr.mxu0 0.0
        %461 = vmatpush1.msra.mxu0 %v429
        %462 = vmatprep.subr.mxu0 0.0
        %463 = vmatpush1.msra.mxu0 0.0
        %464 = vmatprep.subr.mxu0 0.0
        %465 = vmatpush1.msra.mxu0 0.0
        %466 = vmatprep.subr.mxu0 0.0
        %467 = vmatpush1.msra.mxu0 0.0
        %468 = vmatprep.subr.mxu0 0.0
        %469 = vmatpush1.msra.mxu0 0.0
        %470 = vmatprep.subr.mxu0 0.0
        %471 = vmatpush1.msra.mxu0 0.0
        %472 = vmatprep.subr.mxu0 0.0
        %473 = vmatpush1.msra.mxu0 0.0
        %474 = vmatprep.subr.mxu0 0.0
        %475 = vmatpush1.msra.mxu0 0.0
        %476 = vmatprep.subr.mxu0 0.0
        %477 = vmatpush1.msra.mxu0 0.0
        %478 = vmatprep.subr.mxu0 0.0
        %479 = vmatpush1.msra.mxu0 0.0
        %480 = vmatprep.subr.mxu0 0.0
        %481 = vmatpush1.msra.mxu0 0.0
        %482 = vmatprep.subr.mxu0 0.0
        %483 = vmatpush1.msra.mxu0 0.0
        %484 = vmatprep.subr.mxu0 0.0
        %485 = vmatpush1.msra.mxu0 0.0
        %486 = vmatprep.subr.mxu0 0.0
        %487 = vmatpush1.msra.mxu0 0.0
        %488 = vmatprep.subr.mxu0 0.0
        %489 = vmatpush1.msra.mxu0 0.0
        %490 = vmatprep.subr.mxu0 0.0
        %491 = vmatpush1.msra.mxu0 0.0
        %492 = vmatprep.subr.mxu0 0.0
        %493 = vmatpush1.msra.mxu0 0.0
        %494 = vmatprep.mubr.f32.mxu0 0.0
        %495 = vmatmul.mubr.f32.gmra.mrb[0].mxu0 %v412
        %v496 = vpop.f32.mrb[0].mxu0
        %v497 = vadd.f32 0.0, %v496
        %v498 = vpop.f32.mrb[0].mxu0
        %499 = vmatprep.mubr.f32.mxu0 0.0
        %500 = vmatmul.mubr.f32.gmra.mrb[0].mxu0 %v413
        %v501 = vpop.f32.mrb[0].mxu0
        %v502 = vadd.f32 0.0, %v501
        %v503 = vpop.f32.mrb[0].mxu0
        %504 = vdwg.mxu0
        %v505 = vld [vmem:[%s4] sm:$0xf]
        %v506 = vld [vmem:[%s5] sm:$0xf]
        %508 = vset.pattern.permute.xlu0 0
        %509 = vperm.xlu0 %508, %v506
        %v510 = vpop.permute.xlu0 %509
        %vm512 = vcmask 130048
        %v514 = vsel %vm512, %v505, 0
        %516 = vmatprep.subr.mxu0 0.0
        %517 = vmatpush1.msra.mxu0 %v497
        %518 = vmatprep.subr.mxu0 0.0
        %519 = vmatpush1.msra.mxu0 %v502
        %520 = vmatprep.subr.mxu0 0.0
        %521 = vmatpush1.msra.mxu0 0.0
        %522 = vmatprep.subr.mxu0 0.0
        %523 = vmatpush1.msra.mxu0 0.0
        %524 = vmatprep.subr.mxu0 0.0
        %525 = vmatpush1.msra.mxu0 0.0
        %526 = vmatprep.subr.mxu0 0.0
        %527 = vmatpush1.msra.mxu0 0.0
        %528 = vmatprep.subr.mxu0 0.0
        %529 = vmatpush1.msra.mxu0 0.0
        %530 = vmatprep.subr.mxu0 0.0
        %531 = vmatpush1.msra.mxu0 0.0
        %532 = vmatprep.subr.mxu0 0.0
        %533 = vmatpush1.msra.mxu0 0.0
        %534 = vmatprep.subr.mxu0 0.0
        %535 = vmatpush1.msra.mxu0 0.0
        %536 = vmatprep.subr.mxu0 0.0
        %537 = vmatpush1.msra.mxu0 0.0
        %538 = vmatprep.subr.mxu0 0.0
        %539 = vmatpush1.msra.mxu0 0.0
        %540 = vmatprep.subr.mxu0 0.0
        %541 = vmatpush1.msra.mxu0 0.0
        %542 = vmatprep.subr.mxu0 0.0
        %543 = vmatpush1.msra.mxu0 0.0
        %544 = vmatprep.subr.mxu0 0.0
        %545 = vmatpush1.msra.mxu0 0.0
        %546 = vmatprep.subr.mxu0 0.0
        %547 = vmatpush1.msra.mxu0 0.0
        %548 = vmatprep.subr.mxu0 0.0
        %549 = vmatpush1.msra.mxu0 0.0
        %550 = vmatprep.subr.mxu0 0.0
        %551 = vmatpush1.msra.mxu0 0.0
        %552 = vmatprep.subr.mxu0 0.0
        %553 = vmatpush1.msra.mxu0 0.0
        %554 = vmatprep.subr.mxu0 0.0
        %555 = vmatpush1.msra.mxu0 0.0
        %556 = vmatprep.subr.mxu0 0.0
        %557 = vmatpush1.msra.mxu0 0.0
        %558 = vmatprep.subr.mxu0 0.0
        %559 = vmatpush1.msra.mxu0 0.0
        %560 = vmatprep.subr.mxu0 0.0
        %561 = vmatpush1.msra.mxu0 0.0
        %562 = vmatprep.subr.mxu0 0.0
        %563 = vmatpush1.msra.mxu0 0.0
        %564 = vmatprep.subr.mxu0 0.0
        %565 = vmatpush1.msra.mxu0 0.0
        %566 = vmatprep.subr.mxu0 0.0
        %567 = vmatpush1.msra.mxu0 0.0
        %568 = vmatprep.subr.mxu0 0.0
        %569 = vmatpush1.msra.mxu0 0.0
        %570 = vmatprep.subr.mxu0 0.0
        %571 = vmatpush1.msra.mxu0 0.0
        %572 = vmatprep.subr.mxu0 0.0
        %573 = vmatpush1.msra.mxu0 0.0
        %574 = vmatprep.subr.mxu0 0.0
        %575 = vmatpush1.msra.mxu0 0.0
        %576 = vmatprep.subr.mxu0 0.0
        %577 = vmatpush1.msra.mxu0 0.0
        %578 = vmatprep.subr.mxu0 0.0
        %579 = vmatpush1.msra.mxu0 0.0
        %580 = vmatprep.mubr.f32.mxu0 0.0
        %581 = vmatmul.mubr.f32.gmra.mrb[0].mxu0 %v514
        %v582 = vpop.f32.mrb[0].mxu0
        %v583 = vadd.f32 %v510, %v582
        %v584 = vpop.f32.mrb[0].mxu0
        %585 = vdwg.mxu0
        %v586 = vadd.f32 %v583, 3.0
        %v587 = vmax.f32 %v586, 0.0
        %v588 = vmin.f32 %v587, 6.0
        %v589 = vmul.f32 %v583, %v588
        %v590 = vmul.f32 %v589, 0.16666667
        %vm591 = vcmask 125952
        %v592 = vsel %vm591, %v590, 0.0
        %593 = vadd.xlane.f32.xlu0 %v592
        %v594 = vpop.xlane.xlu0 %593
        %v595 = vrcp.pop 16.0
        %v596 = vmul.f32 %v594, %v595
        %598 = vrot.lane.b32.xlu0 %v590, 112
        %v599 = vpop.permute.xlu0 %598
        %vm601 = vcmask 60416
        %v602 = vsel %vm601, %v599, 0.0
        %603 = vadd.xlane.f32.xlu0 %v602
        %v604 = vpop.xlane.xlu0 %603
        %v605 = vrcp.pop 8.0
        %v606 = vmul.f32 %v604, %v605
        %v607 = vadd.f32 %v596, %v606
        %v608 = vmul.f32 %v607, 0.5
        %v609 = vld [vmem:[%s6] sm:$0xff]
        %v610 = vld [vmem:[%s6 + $0x8] sm:$0xff]
        %v611 = vld [vmem:[%s7] sm:$0xff]
        %v612 = vld [vmem:[%s7 + $0x8] sm:$0xff]
        %614 = vset.pattern.permute.xlu0 0
        %615 = vperm.xlu0 %614, %v611
        %v616 = vpop.permute.xlu0 %615
        %619 = vset.pattern.permute.xlu0 0
        %620 = vperm.xlu0 %619, %v612
        %v621 = vpop.permute.xlu0 %620
        %vm623 = vcmask 31744
        %v625 = vsel %vm623, %v609, 0
        %v628 = vsel %vm623, %v610, 0
        %vm630 = vcmask 1043456
        %v631 = vsel %vm630, %v590, 0
        %633 = vmatprep.subr.mxu0 0.0
        %634 = vmatpush1.msra.mxu0 %v631
        %635 = vmatprep.subr.mxu0 0.0
        %636 = vmatpush1.msra.mxu0 0.0
        %637 = vmatprep.subr.mxu0 0.0
        %638 = vmatpush1.msra.mxu0 0.0
        %639 = vmatprep.subr.mxu0 0.0
        %640 = vmatpush1.msra.mxu0 0.0
        %641 = vmatprep.subr.mxu0 0.0
        %642 = vmatpush1.msra.mxu0 0.0
        %643 = vmatprep.subr.mxu0 0.0
        %644 = vmatpush1.msra.mxu0 0.0
        %645 = vmatprep.subr.mxu0 0.0
        %646 = vmatpush1.msra.mxu0 0.0
        %647 = vmatprep.subr.mxu0 0.0
        %648 = vmatpush1.msra.mxu0 0.0
        %649 = vmatprep.subr.mxu0 0.0
        %650 = vmatpush1.msra.mxu0 0.0
        %651 = vmatprep.subr.mxu0 0.0
        %652 = vmatpush1.msra.mxu0 0.0
        %653 = vmatprep.subr.mxu0 0.0
        %654 = vmatpush1.msra.mxu0 0.0
        %655 = vmatprep.subr.mxu0 0.0
        %656 = vmatpush1.msra.mxu0 0.0
        %657 = vmatprep.subr.mxu0 0.0
        %658 = vmatpush1.msra.mxu0 0.0
        %659 = vmatprep.subr.mxu0 0.0
        %660 = vmatpush1.msra.mxu0 0.0
        %661 = vmatprep.subr.mxu0 0.0
        %662 = vmatpush1.msra.mxu0 0.0
        %663 = vmatprep.subr.mxu0 0.0
        %664 = vmatpush1.msra.mxu0 0.0
        %665 = vmatprep.subr.mxu0 0.0
        %666 = vmatpush1.msra.mxu0 0.0
        %667 = vmatprep.subr.mxu0 0.0
        %668 = vmatpush1.msra.mxu0 0.0
        %669 = vmatprep.subr.mxu0 0.0
        %670 = vmatpush1.msra.mxu0 0.0
        %671 = vmatprep.subr.mxu0 0.0
        %672 = vmatpush1.msra.mxu0 0.0
        %673 = vmatprep.subr.mxu0 0.0
        %674 = vmatpush1.msra.mxu0 0.0
        %675 = vmatprep.subr.mxu0 0.0
        %676 = vmatpush1.msra.mxu0 0.0
        %677 = vmatprep.subr.mxu0 0.0
        %678 = vmatpush1.msra.mxu0 0.0
        %679 = vmatprep.subr.mxu0 0.0
        %680 = vmatpush1.msra.mxu0 0.0
        %681 = vmatprep.subr.mxu0 0.0
        %682 = vmatpush1.msra.mxu0 0.0
        %683 = vmatprep.subr.mxu0 0.0
        %684 = vmatpush1.msra.mxu0 0.0
        %685 = vmatprep.subr.mxu0 0.0
        %686 = vmatpush1.msra.mxu0 0.0
        %687 = vmatprep.subr.mxu0 0.0
        %688 = vmatpush1.msra.mxu0 0.0
        %689 = vmatprep.subr.mxu0 0.0
        %690 = vmatpush1.msra.mxu0 0.0
        %691 = vmatprep.subr.mxu0 0.0
        %692 = vmatpush1.msra.mxu0 0.0
        %693 = vmatprep.subr.mxu0 0.0
        %694 = vmatpush1.msra.mxu0 0.0
        %695 = vmatprep.subr.mxu0 0.0
        %696 = vmatpush1.msra.mxu0 0.0
        %697 = vmatprep.mubr.f32.mxu0 0.0
        %698 = vmatmul.mubr.f32.gmra.mrb[0].mxu0 %v625
        %v699 = vpop.f32.mrb[0].mxu0
        %v700 = vadd.f32 %v616, %v699
        %v701 = vpop.f32.mrb[0].mxu0
        %702 = vmatprep.mubr.f32.mxu0 0.0
        %703 = vmatmul.mubr.f32.gmra.mrb[0].mxu0 %v628
        %v704 = vpop.f32.mrb[0].mxu0
        %v705 = vadd.f32 %v621, %v704
        %v706 = vpop.f32.mrb[0].mxu0
        %707 = vdwg.mxu0
        %v708 = vxor.u32 %v700, 2147483648
        %v709 = vxor.u32 %v705, 2147483648
        %v710 = vmul.f32 %v708, 1.442695
        %v711 = vpow.pop %v710
        %v712 = vmul.f32 %v709, 1.442695
        %v713 = vpow.pop %v712
        %v714 = vadd.f32 %v711, 1.0
        %v715 = vadd.f32 %v713, 1.0
        %v716 = vrcp.pop %v714
        %v717 = vmul.f32 1.0, %v716
        %v718 = vrcp.pop %v715
        %v719 = vmul.f32 1.0, %v718
        %v720 = vld [vmem:[%s8] sm:$0xff]
        %v721 = vld [vmem:[%s8 + $0x8] sm:$0xff]
        %v722 = vld [vmem:[%s9] sm:$0xff]
        %v723 = vld [vmem:[%s9 + $0x8] sm:$0xff]
        %725 = vset.pattern.permute.xlu0 0
        %726 = vperm.xlu0 %725, %v722
        %v727 = vpop.permute.xlu0 %726
        %730 = vset.pattern.permute.xlu0 0
        %731 = vperm.xlu0 %730, %v723
        %v732 = vpop.permute.xlu0 %731
        %v735 = vsel %vm623, %v720, 0
        %v738 = vsel %vm623, %v721, 0
        %v740 = vsel %vm630, %v599, 0
        %742 = vmatprep.subr.mxu0 0.0
        %743 = vmatpush1.msra.mxu0 %v740
        %744 = vmatprep.subr.mxu0 0.0
        %745 = vmatpush1.msra.mxu0 0.0
        %746 = vmatprep.subr.mxu0 0.0
        %747 = vmatpush1.msra.mxu0 0.0
        %748 = vmatprep.subr.mxu0 0.0
        %749 = vmatpush1.msra.mxu0 0.0
        %750 = vmatprep.subr.mxu0 0.0
        %751 = vmatpush1.msra.mxu0 0.0
        %752 = vmatprep.subr.mxu0 0.0
        %753 = vmatpush1.msra.mxu0 0.0
        %754 = vmatprep.subr.mxu0 0.0
        %755 = vmatpush1.msra.mxu0 0.0
        %756 = vmatprep.subr.mxu0 0.0
        %757 = vmatpush1.msra.mxu0 0.0
        %758 = vmatprep.subr.mxu0 0.0
        %759 = vmatpush1.msra.mxu0 0.0
        %760 = vmatprep.subr.mxu0 0.0
        %761 = vmatpush1.msra.mxu0 0.0
        %762 = vmatprep.subr.mxu0 0.0
        %763 = vmatpush1.msra.mxu0 0.0
        %764 = vmatprep.subr.mxu0 0.0
        %765 = vmatpush1.msra.mxu0 0.0
        %766 = vmatprep.subr.mxu0 0.0
        %767 = vmatpush1.msra.mxu0 0.0
        %768 = vmatprep.subr.mxu0 0.0
        %769 = vmatpush1.msra.mxu0 0.0
        %770 = vmatprep.subr.mxu0 0.0
        %771 = vmatpush1.msra.mxu0 0.0
        %772 = vmatprep.subr.mxu0 0.0
        %773 = vmatpush1.msra.mxu0 0.0
        %774 = vmatprep.subr.mxu0 0.0
        %775 = vmatpush1.msra.mxu0 0.0
        %776 = vmatprep.subr.mxu0 0.0
        %777 = vmatpush1.msra.mxu0 0.0
        %778 = vmatprep.subr.mxu0 0.0
        %779 = vmatpush1.msra.mxu0 0.0
        %780 = vmatprep.subr.mxu0 0.0
        %781 = vmatpush1.msra.mxu0 0.0
        %782 = vmatprep.subr.mxu0 0.0
        %783 = vmatpush1.msra.mxu0 0.0
        %784 = vmatprep.subr.mxu0 0.0
        %785 = vmatpush1.msra.mxu0 0.0
        %786 = vmatprep.subr.mxu0 0.0
        %787 = vmatpush1.msra.mxu0 0.0
        %788 = vmatprep.subr.mxu0 0.0
        %789 = vmatpush1.msra.mxu0 0.0
        %790 = vmatprep.subr.mxu0 0.0
        %791 = vmatpush1.msra.mxu0 0.0
        %792 = vmatprep.subr.mxu0 0.0
        %793 = vmatpush1.msra.mxu0 0.0
        %794 = vmatprep.subr.mxu0 0.0
        %795 = vmatpush1.msra.mxu0 0.0
        %796 = vmatprep.subr.mxu0 0.0
        %797 = vmatpush1.msra.mxu0 0.0
        %798 = vmatprep.subr.mxu0 0.0
        %799 = vmatpush1.msra.mxu0 0.0
        %800 = vmatprep.subr.mxu0 0.0
        %801 = vmatpush1.msra.mxu0 0.0
        %802 = vmatprep.subr.mxu0 0.0
        %803 = vmatpush1.msra.mxu0 0.0
        %804 = vmatprep.subr.mxu0 0.0
        %805 = vmatpush1.msra.mxu0 0.0
        %806 = vmatprep.mubr.f32.mxu0 0.0
        %807 = vmatmul.mubr.f32.gmra.mrb[0].mxu0 %v735
        %v808 = vpop.f32.mrb[0].mxu0
        %v809 = vadd.f32 %v727, %v808
        %v810 = vpop.f32.mrb[0].mxu0
        %811 = vmatprep.mubr.f32.mxu0 0.0
        %812 = vmatmul.mubr.f32.gmra.mrb[0].mxu0 %v738
        %v813 = vpop.f32.mrb[0].mxu0
        %v814 = vadd.f32 %v732, %v813
        %v815 = vpop.f32.mrb[0].mxu0
        %816 = vdwg.mxu0
        %v817 = vxor.u32 %v809, 2147483648
        %v818 = vxor.u32 %v814, 2147483648
        %v819 = vmul.f32 %v817, 1.442695
        %v820 = vpow.pop %v819
        %v821 = vmul.f32 %v818, 1.442695
        %v822 = vpow.pop %v821
        %v823 = vadd.f32 %v820, 1.0
        %v824 = vadd.f32 %v822, 1.0
        %v825 = vrcp.pop %v823
        %v826 = vmul.f32 1.0, %v825
        %v827 = vrcp.pop %v824
        %v828 = vmul.f32 1.0, %v827
        %v829 = vld [vmem:[%s10] sm:$0xff]
        %v830 = vld [vmem:[%s10 + $0x8] sm:$0xff]
        %v831 = vld [vmem:[%s11] sm:$0xff]
        %v832 = vld [vmem:[%s11 + $0x8] sm:$0xff]
        %v834 = vsel %vm623, %v829, 0
        %v837 = vsel %vm623, %v830, 0
        %v840 = vsel %vm630, %v608, 0
        %842 = vmatprep.subr.mxu0 0.0
        %843 = vmatpush1.msra.mxu0 %v840
        %844 = vmatprep.subr.mxu0 0.0
        %845 = vmatpush1.msra.mxu0 0.0
        %846 = vmatprep.subr.mxu0 0.0
        %847 = vmatpush1.msra.mxu0 0.0
        %848 = vmatprep.subr.mxu0 0.0
        %849 = vmatpush1.msra.mxu0 0.0
        %850 = vmatprep.subr.mxu0 0.0
        %851 = vmatpush1.msra.mxu0 0.0
        %852 = vmatprep.subr.mxu0 0.0
        %853 = vmatpush1.msra.mxu0 0.0
        %854 = vmatprep.subr.mxu0 0.0
        %855 = vmatpush1.msra.mxu0 0.0
        %856 = vmatprep.subr.mxu0 0.0
        %857 = vmatpush1.msra.mxu0 0.0
        %858 = vmatprep.subr.mxu0 0.0
        %859 = vmatpush1.msra.mxu0 0.0
        %860 = vmatprep.subr.mxu0 0.0
        %861 = vmatpush1.msra.mxu0 0.0
        %862 = vmatprep.subr.mxu0 0.0
        %863 = vmatpush1.msra.mxu0 0.0
        %864 = vmatprep.subr.mxu0 0.0
        %865 = vmatpush1.msra.mxu0 0.0
        %866 = vmatprep.subr.mxu0 0.0
        %867 = vmatpush1.msra.mxu0 0.0
        %868 = vmatprep.subr.mxu0 0.0
        %869 = vmatpush1.msra.mxu0 0.0
        %870 = vmatprep.subr.mxu0 0.0
        %871 = vmatpush1.msra.mxu0 0.0
        %872 = vmatprep.subr.mxu0 0.0
        %873 = vmatpush1.msra.mxu0 0.0
        %874 = vmatprep.subr.mxu0 0.0
        %875 = vmatpush1.msra.mxu0 0.0
        %876 = vmatprep.subr.mxu0 0.0
        %877 = vmatpush1.msra.mxu0 0.0
        %878 = vmatprep.subr.mxu0 0.0
        %879 = vmatpush1.msra.mxu0 0.0
        %880 = vmatprep.subr.mxu0 0.0
        %881 = vmatpush1.msra.mxu0 0.0
        %882 = vmatprep.subr.mxu0 0.0
        %883 = vmatpush1.msra.mxu0 0.0
        %884 = vmatprep.subr.mxu0 0.0
        %885 = vmatpush1.msra.mxu0 0.0
        %886 = vmatprep.subr.mxu0 0.0
        %887 = vmatpush1.msra.mxu0 0.0
        %888 = vmatprep.subr.mxu0 0.0
        %889 = vmatpush1.msra.mxu0 0.0
        %890 = vmatprep.subr.mxu0 0.0
        %891 = vmatpush1.msra.mxu0 0.0
        %892 = vmatprep.subr.mxu0 0.0
        %893 = vmatpush1.msra.mxu0 0.0
        %894 = vmatprep.subr.mxu0 0.0
        %895 = vmatpush1.msra.mxu0 0.0
        %896 = vmatprep.subr.mxu0 0.0
        %897 = vmatpush1.msra.mxu0 0.0
        %898 = vmatprep.subr.mxu0 0.0
        %899 = vmatpush1.msra.mxu0 0.0
        %900 = vmatprep.subr.mxu0 0.0
        %901 = vmatpush1.msra.mxu0 0.0
        %902 = vmatprep.subr.mxu0 0.0
        %903 = vmatpush1.msra.mxu0 0.0
        %904 = vmatprep.subr.mxu0 0.0
        %905 = vmatpush1.msra.mxu0 0.0
        %906 = vmatprep.mubr.f32.mxu0 0.0
        %907 = vmatmul.mubr.f32.gmra.mrb[0].mxu0 %v834
        %v908 = vpop.f32.mrb[0].mxu0
        %v909 = vadd.f32 %v831, %v908
        %v910 = vpop.f32.mrb[0].mxu0
        %911 = vmatprep.mubr.f32.mxu0 0.0
        %912 = vmatmul.mubr.f32.gmra.mrb[0].mxu0 %v837
        %v913 = vpop.f32.mrb[0].mxu0
        %v914 = vadd.f32 %v832, %v913
        %v915 = vpop.f32.mrb[0].mxu0
        %916 = vdwg.mxu0
        %v917 = vxor.u32 %v909, 2147483648
        %v918 = vxor.u32 %v914, 2147483648
        %v919 = vmul.f32 %v917, 1.442695
        %v920 = vpow.pop %v919
        %v921 = vmul.f32 %v918, 1.442695
        %v922 = vpow.pop %v921
        %v923 = vadd.f32 %v920, 1.0
        %v924 = vadd.f32 %v922, 1.0
        %v925 = vrcp.pop %v923
        %v926 = vmul.f32 1.0, %v925
        %v927 = vrcp.pop %v924
        %v928 = vmul.f32 1.0, %v927
        %930 = vset.pattern.permute.xlu0 0
        %931 = vperm.xlu0 %930, %v926
        %v932 = vpop.permute.xlu0 %931
        %935 = vset.pattern.permute.xlu0 0
        %936 = vperm.xlu0 %935, %v928
        %v937 = vpop.permute.xlu0 %936
        %v939 = vmul.f32 %v826, %v932
        %v940 = vmul.f32 %v828, %v937
        %v941 = vld [vmem:[%s2] sm:$0xff]
        %v942 = vld [vmem:[%s2 + $0x8] sm:$0xff]
        %v944 = vsel %vm512, %v717, 0
        %v947 = vsel %vm512, %v719, 0
        %949 = vmatprep.subr.mxu0 0.0
        %950 = vmatpush1.msra.mxu0 %v941
        %951 = vmatprep.subr.mxu0 0.0
        %952 = vmatpush1.msra.mxu0 %v942
        %953 = vmatprep.subr.mxu0 0.0
        %954 = vmatpush1.msra.mxu0 0.0
        %955 = vmatprep.subr.mxu0 0.0
        %956 = vmatpush1.msra.mxu0 0.0
        %957 = vmatprep.subr.mxu0 0.0
        %958 = vmatpush1.msra.mxu0 0.0
        %959 = vmatprep.subr.mxu0 0.0
        %960 = vmatpush1.msra.mxu0 0.0
        %961 = vmatprep.subr.mxu0 0.0
        %962 = vmatpush1.msra.mxu0 0.0
        %963 = vmatprep.subr.mxu0 0.0
        %964 = vmatpush1.msra.mxu0 0.0
        %965 = vmatprep.subr.mxu0 0.0
        %966 = vmatpush1.msra.mxu0 0.0
        %967 = vmatprep.subr.mxu0 0.0
        %968 = vmatpush1.msra.mxu0 0.0
        %969 = vmatprep.subr.mxu0 0.0
        %970 = vmatpush1.msra.mxu0 0.0
        %971 = vmatprep.subr.mxu0 0.0
        %972 = vmatpush1.msra.mxu0 0.0
        %973 = vmatprep.subr.mxu0 0.0
        %974 = vmatpush1.msra.mxu0 0.0
        %975 = vmatprep.subr.mxu0 0.0
        %976 = vmatpush1.msra.mxu0 0.0
        %977 = vmatprep.subr.mxu0 0.0
        %978 = vmatpush1.msra.mxu0 0.0
        %979 = vmatprep.subr.mxu0 0.0
        %980 = vmatpush1.msra.mxu0 0.0
        %981 = vmatprep.subr.mxu0 0.0
        %982 = vmatpush1.msra.mxu0 0.0
        %983 = vmatprep.subr.mxu0 0.0
        %984 = vmatpush1.msra.mxu0 0.0
        %985 = vmatprep.subr.mxu0 0.0
        %986 = vmatpush1.msra.mxu0 0.0
        %987 = vmatprep.subr.mxu0 0.0
        %988 = vmatpush1.msra.mxu0 0.0
        %989 = vmatprep.subr.mxu0 0.0
        %990 = vmatpush1.msra.mxu0 0.0
        %991 = vmatprep.subr.mxu0 0.0
        %992 = vmatpush1.msra.mxu0 0.0
        %993 = vmatprep.subr.mxu0 0.0
        %994 = vmatpush1.msra.mxu0 0.0
        %995 = vmatprep.subr.mxu0 0.0
        %996 = vmatpush1.msra.mxu0 0.0
        %997 = vmatprep.subr.mxu0 0.0
        %998 = vmatpush1.msra.mxu0 0.0
        %999 = vmatprep.subr.mxu0 0.0
        %1000 = vmatpush1.msra.mxu0 0.0
        %1001 = vmatprep.subr.mxu0 0.0
        %1002 = vmatpush1.msra.mxu0 0.0
        %1003 = vmatprep.subr.mxu0 0.0
        %1004 = vmatpush1.msra.mxu0 0.0
        %1005 = vmatprep.subr.mxu0 0.0
        %1006 = vmatpush1.msra.mxu0 0.0
        %1007 = vmatprep.subr.mxu0 0.0
        %1008 = vmatpush1.msra.mxu0 0.0
        %1009 = vmatprep.subr.mxu0 0.0
        %1010 = vmatpush1.msra.mxu0 0.0
        %1011 = vmatprep.subr.mxu0 0.0
        %1012 = vmatpush1.msra.mxu0 0.0
        %1013 = vmatprep.mubr.f32.mxu0 0.0
        %1014 = vmatmul.mubr.f32.gmra.mrb[0].mxu0 %v944
        %v1015 = vpop.f32.mrb[0].mxu0
        %v1016 = vadd.f32 0.0, %v1015
        %v1017 = vpop.f32.mrb[0].mxu0
        %1018 = vmatprep.mubr.f32.mxu0 0.0
        %1019 = vmatmul.mubr.f32.gmra.mrb[0].mxu0 %v947
        %v1020 = vpop.f32.mrb[0].mxu0
        %v1021 = vadd.f32 0.0, %v1020
        %v1022 = vpop.f32.mrb[0].mxu0
        %1023 = vdwg.mxu0
        %v1024 = vld [vmem:[%s3] sm:$0xff]
        %vm1025 = vcmask 64512
        %v1027 = vsel %vm1025, %v939, 0
        %v1030 = vsel %vm1025, %v940, 0
        %1032 = vmatprep.subr.mxu0 0.0
        %1033 = vmatpush1.msra.mxu0 %v1024
        %1034 = vmatprep.subr.mxu0 0.0
        %1035 = vmatpush1.msra.mxu0 0.0
        %1036 = vmatprep.subr.mxu0 0.0
        %1037 = vmatpush1.msra.mxu0 0.0
        %1038 = vmatprep.subr.mxu0 0.0
        %1039 = vmatpush1.msra.mxu0 0.0
        %1040 = vmatprep.subr.mxu0 0.0
        %1041 = vmatpush1.msra.mxu0 0.0
        %1042 = vmatprep.subr.mxu0 0.0
        %1043 = vmatpush1.msra.mxu0 0.0
        %1044 = vmatprep.subr.mxu0 0.0
        %1045 = vmatpush1.msra.mxu0 0.0
        %1046 = vmatprep.subr.mxu0 0.0
        %1047 = vmatpush1.msra.mxu0 0.0
        %1048 = vmatprep.subr.mxu0 0.0
        %1049 = vmatpush1.msra.mxu0 0.0
        %1050 = vmatprep.subr.mxu0 0.0
        %1051 = vmatpush1.msra.mxu0 0.0
        %1052 = vmatprep.subr.mxu0 0.0
        %1053 = vmatpush1.msra.mxu0 0.0
        %1054 = vmatprep.subr.mxu0 0.0
        %1055 = vmatpush1.msra.mxu0 0.0
        %1056 = vmatprep.subr.mxu0 0.0
        %1057 = vmatpush1.msra.mxu0 0.0
        %1058 = vmatprep.subr.mxu0 0.0
        %1059 = vmatpush1.msra.mxu0 0.0
        %1060 = vmatprep.subr.mxu0 0.0
        %1061 = vmatpush1.msra.mxu0 0.0
        %1062 = vmatprep.subr.mxu0 0.0
        %1063 = vmatpush1.msra.mxu0 0.0
        %1064 = vmatprep.subr.mxu0 0.0
        %1065 = vmatpush1.msra.mxu0 0.0
        %1066 = vmatprep.subr.mxu0 0.0
        %1067 = vmatpush1.msra.mxu0 0.0
        %1068 = vmatprep.subr.mxu0 0.0
        %1069 = vmatpush1.msra.mxu0 0.0
        %1070 = vmatprep.subr.mxu0 0.0
        %1071 = vmatpush1.msra.mxu0 0.0
        %1072 = vmatprep.subr.mxu0 0.0
        %1073 = vmatpush1.msra.mxu0 0.0
        %1074 = vmatprep.subr.mxu0 0.0
        %1075 = vmatpush1.msra.mxu0 0.0
        %1076 = vmatprep.subr.mxu0 0.0
        %1077 = vmatpush1.msra.mxu0 0.0
        %1078 = vmatprep.subr.mxu0 0.0
        %1079 = vmatpush1.msra.mxu0 0.0
        %1080 = vmatprep.subr.mxu0 0.0
        %1081 = vmatpush1.msra.mxu0 0.0
        %1082 = vmatprep.subr.mxu0 0.0
        %1083 = vmatpush1.msra.mxu0 0.0
        %1084 = vmatprep.subr.mxu0 0.0
        %1085 = vmatpush1.msra.mxu0 0.0
        %1086 = vmatprep.subr.mxu0 0.0
        %1087 = vmatpush1.msra.mxu0 0.0
        %1088 = vmatprep.subr.mxu0 0.0
        %1089 = vmatpush1.msra.mxu0 0.0
        %1090 = vmatprep.subr.mxu0 0.0
        %1091 = vmatpush1.msra.mxu0 0.0
        %1092 = vmatprep.subr.mxu0 0.0
        %1093 = vmatpush1.msra.mxu0 0.0
        %1094 = vmatprep.subr.mxu0 0.0
        %1095 = vmatpush1.msra.mxu0 0.0
        %1096 = vmatprep.mubr.f32.mxu0 0.0
        %1097 = vmatmul.mubr.f32.gmra.mrb[0].mxu0 %v1027
        %v1098 = vpop.f32.mrb[0].mxu0
        %v1099 = vadd.f32 0.0, %v1098
        %v1100 = vpop.f32.mrb[0].mxu0
        %1101 = vmatprep.mubr.f32.mxu0 0.0
        %1102 = vmatmul.mubr.f32.gmra.mrb[0].mxu0 %v1030
        %v1103 = vpop.f32.mrb[0].mxu0
        %v1104 = vadd.f32 0.0, %v1103
        %v1105 = vpop.f32.mrb[0].mxu0
        %1106 = vdwg.mxu0
        %v1107 = vmul.f32 %v1016, %v1099
        %v1108 = vmul.f32 %v1021, %v1104
        %1109 = vst [vmem:[%s406] sm:$0xff] %v1107
        %1110 = vst [vmem:[%s406 + $0x8] sm:$0xff] %v1108
        %s1111 = sand.u32 %s291, 1
        %s1112 = scalar_lea.sflag [#allocation3], %s1111
        %s1113 = sand.u32 %s291, 1
        %s1114 = smul.addr %s1113, 16
        %s1115 = scalar_lea.vmem [#allocation2], %s1114
        // Predicated region
        $region69: #{tpu_custom_call.1} parent=67 // pred_check
          %p1116 = pneg %p301
        $region70: #{tpu_custom_call.1} parent=67 // pred_check_branch
          %1118 = sbr.rel (%p1116) target = $region72
        $region71: #{tpu_custom_call.1} parent=67 // pred_region
          %s1120 = ssub.s32 256, 256
          %1121 = vsyncadd %s1112, %s1120
          %s1122 = smul.addr %s26, 2
          %s1123 = smul.addr %s1122, 128
          %s1124 = scalar_lea.hbm %s12, %s1123
          %s1125 = sshll.u32 %s1115, 4
          %s1126 = int_to_ptr.vmem [resolvable:$true] %s1125
          %1131 = dma.vmem_to_hbm [thread:$0]  %s1126, 256, %s1124, %s1112, 128, 128, 8
        $region72: #{tpu_custom_call.1} parent=67 // pred_fallthru
          _
      $region68: #{tpu_custom_call.1} parent=5 // pred_fallthru
        _
      %p1132 = scmp.le.s32.totalorder 2, %s21
      // Predicated region
      $region73: #{tpu_custom_call.1} parent=5 // pred_check
        %p1133 = pneg %p1132
      $region74: #{tpu_custom_call.1} parent=5 // pred_check_branch
        %1135 = sbr.rel (%p1133) target = $region76
      $region75: #{tpu_custom_call.1} parent=5 // pred_region
        %s1136 = ssub.s32 %s21, 2
        // Predicated region
        $region77: #{tpu_custom_call.1} parent=75 // pred_check
          %p1137 = pneg %p307
        $region78: #{tpu_custom_call.1} parent=75 // pred_check_branch
          %1139 = sbr.rel (%p1137) target = $region80
        $region79: #{tpu_custom_call.1} parent=75 // pred_region
          %s1140 = sand.u32 %s292, 1
          %s1141 = scalar_lea.sflag [#allocation3], %s1140
          %s1142 = sand.u32 %s292, 1
          %s1143 = smul.addr %s1142, 16
          %s1144 = scalar_lea.vmem [#allocation2], %s1143
          %1145 = dma.done %s1141, 256
        $region80: #{tpu_custom_call.1} parent=75 // pred_fallthru
          _
      $region76: #{tpu_custom_call.1} parent=5 // pred_fallthru
        _
    $region6: #{tpu_custom_call.1} parent=1 // loop_footer
      %s25 = sadd.s32 1, %s21
    $region7: #{tpu_custom_call.1} parent=1 // loop_footer_branch
      %20 = sbr.rel target = $region3
    $region8: #{tpu_custom_call.1} parent=1 // loop_exit
      _
    %1146 = vsyncpa [#allocation3], 1
    %s1147 = scalar_lea.sflag [#allocation3], 1
    %1148 = vsyncpa %s1147, 1

</llo_original>
